<compile_context>
chip_gen: v6e
topology: v6e:2x2x1
jax: 0.10.0
libtpu: 0.0.40
codegen_flags: <defaults>
</compile_context>

<pallas_src>
import functools

import jax
import jax.numpy as jnp
from jax.experimental import pallas as pl
from jax.experimental.pallas import tpu as pltpu


def _round_up(n, m):
    return ((n + m - 1) // m) * m


def _frn_kernel(eps_ref, x_ref, w_ref, b_ref, o_ref, *, inv_hw):
    # eps_ref: (1,) in SMEM (scalar prefetch)
    # x_ref:   (TM, HW)   w_ref/b_ref: (TM, 1)   o_ref: (TM, HW)
    x = x_ref[...].astype(jnp.float32)                       # (TM, HW)
    # Full (unpadded) spatial extent per row -> exact mean via sum * (1/HW).
    nu2 = jnp.sum(x * x, axis=-1, keepdims=True) * inv_hw    # (TM, 1)
    eps = jnp.abs(eps_ref[0])                                # scalar (SMEM)
    inv = jax.lax.rsqrt(nu2 + eps)                           # (TM, 1), EUP
    scale = w_ref[...].astype(jnp.float32) * inv             # fold gamma
    beta = b_ref[...].astype(jnp.float32)                    # (TM, 1)
    o_ref[...] = (scale * x + beta).astype(o_ref.dtype)


def _choose_tm(rows, hw, itemsize):
    # ~4 MiB per x tile => <= ~17 MiB live with double-buffered in+out tiles,
    # comfortably inside scoped VMEM on all of v5e / v6e / v7x.
    tile_budget = 4 * 1024 * 1024
    row_bytes = max(1, hw * itemsize)
    max_tm = tile_budget // row_bytes
    max_tm = max(8, (max_tm // 8) * 8)   # multiple of 8 sublanes
    max_tm = min(max_tm, 2048)
    return int(min(max_tm, _round_up(rows, 8)))


def frn_forward(x, weight, bias, eps):
    """FRN forward.

    x:      [B, C, H, W] (NCHW, matching the PyTorch module)
    weight: [C]  (gamma)
    bias:   [C]  (beta)
    eps:    [1]  (buffer or learnable)
    """
    B, C, H, W = x.shape
    HW = H * W
    rows = B * C
    dtype = x.dtype
    itemsize = jnp.dtype(dtype).itemsize

    # [B*C, H*W] view (free reshape for contiguous NCHW).
    x_flat = x.reshape(rows, HW)

    # Per-row gamma/beta: row r = b*C + c -> channel c.  Tiny layout plumbing.
    w_rows = jnp.broadcast_to(weight.astype(dtype).reshape(1, C), (B, C)).reshape(rows, 1)
    b_rows = jnp.broadcast_to(bias.astype(dtype).reshape(1, C), (B, C)).reshape(rows, 1)

    eps_s = jnp.asarray(eps).reshape(1).astype(jnp.float32)

    TM = _choose_tm(rows, HW, itemsize)
    grid = (pl.cdiv(rows, TM),)
    kernel = functools.partial(_frn_kernel, inv_hw=float(1.0 / HW))

    tile_bytes = TM * HW * itemsize
    # Headroom for 2x input + 2x output buffers (+ tiny param tiles); v5e's
    # default scoped limit is only 16 MiB, so raise it explicitly (cap for v7x).
    vmem_limit = int(min(64 * 2**20, max(32 * 2**20, 5 * tile_bytes + (1 << 20))))

    # TODO(synk): for extremely large H*W (a single 8-row tile blowing VMEM),
    # switch to a two-pass / accumulator structure over a tiled HW axis.

    out = pl.pallas_call(
        kernel,
        out_shape=jax.ShapeDtypeStruct((rows, HW), dtype),
        grid_spec=pltpu.PrefetchScalarGridSpec(
            num_scalar_prefetch=1,  # eps -> SMEM
            grid=grid,
            in_specs=[
                pl.BlockSpec((TM, HW), lambda i, eps_ref: (i, 0)),
                pl.BlockSpec((TM, 1), lambda i, eps_ref: (i, 0)),
                pl.BlockSpec((TM, 1), lambda i, eps_ref: (i, 0)),
            ],
            out_specs=pl.BlockSpec((TM, HW), lambda i, eps_ref: (i, 0)),
        ),
        compiler_params=pltpu.CompilerParams(
            dimension_semantics=("parallel",),
            vmem_limit_bytes=vmem_limit,
        ),
    )(eps_s, x_flat, w_rows, b_rows)

    return out.reshape(B, C, H, W)


if __name__ == "__main__":
    key = jax.random.PRNGKey(0)
    B, C, H, W = 2, 4, 16, 16

    x = jax.random.normal(key, (B, C, H, W), dtype=jnp.float32)

    # Deterministic parameter init matching FRN.reset_parameters():
    # weight (gamma) = ones, bias (beta) = zeros, eps buffer = 1e-6.
    num_features = C
    weight = jnp.ones((num_features,), dtype=jnp.float32)
    bias = jnp.zeros((num_features,), dtype=jnp.float32)
    eps = jnp.array([1e-6], dtype=jnp.float32)

    out = frn_forward(x, weight, bias, eps)
    out = jax.block_until_ready(out)

    # Reference check in plain JAX (same semantics as the PyTorch forward).
    nu2 = jnp.mean(jnp.square(x), axis=(2, 3), keepdims=True)
    ref = x * jax.lax.rsqrt(nu2 + jnp.abs(eps[0]))
    ref = weight.reshape(1, C, 1, 1) * ref + bias.reshape(1, C, 1, 1)
    assert jnp.allclose(out, ref, atol=1e-5, rtol=1e-5)

    print("KERNEL_OK")
</pallas_src>

<mosaic_0001>
module attributes {stable_mosaic.version = 11 : i64} {
  func.func @_frn_kernel(%arg0: i32, %arg1: memref<1xf32, #tpu.memory_space<smem>>, %arg2: memref<8x256xf32, #tpu.memory_space<vmem>>, %arg3: memref<8x1xf32, #tpu.memory_space<vmem>>, %arg4: memref<8x1xf32, #tpu.memory_space<vmem>>, %arg5: memref<8x256xf32, #tpu.memory_space<vmem>>) attributes {dimension_semantics = [#tpu.dimension_semantics<parallel>], iteration_bounds = array<i64: 1>, scalar_prefetch = 1 : i64, scratch_operands = 0 : i64, tpu.core_type = #tpu.core_type<tc>, window_params = [{transform_indices = @transform_0, window_bounds = array<i64: 8, 256>}, {transform_indices = @transform_1, window_bounds = array<i64: 8, 1>}, {transform_indices = @transform_2, window_bounds = array<i64: 8, 1>}, {transform_indices = @transform_3, window_bounds = array<i64: 8, 256>}]} {
    %c0 = arith.constant 0 : index
    %c0_0 = arith.constant 0 : index
    %0 = vector.load %arg2[%c0, %c0_0] : memref<8x256xf32, #tpu.memory_space<vmem>>, vector<8x256xf32>
    %1 = arith.mulf %0, %0 : vector<8x256xf32>
    %cst = arith.constant dense<0.000000e+00> : vector<8xf32>
    %2 = vector.multi_reduction <add>, %1, %cst [1] : vector<8x256xf32> to vector<8xf32>
    %3 = vector.shape_cast %2 : vector<8xf32> to vector<8x1xf32>
    %cst_1 = arith.constant 3.906250e-03 : f32
    %4 = vector.broadcast %cst_1 : f32 to vector<8x1xf32>
    %5 = arith.mulf %3, %4 : vector<8x1xf32>
    %c0_2 = arith.constant 0 : index
    %6 = memref.load %arg1[%c0_2] : memref<1xf32, #tpu.memory_space<smem>>
    %7 = math.absf %6 : f32
    %8 = vector.broadcast %7 : f32 to vector<8x1xf32>
    %9 = arith.addf %5, %8 : vector<8x1xf32>
    %10 = math.rsqrt %9 : vector<8x1xf32>
    %c0_3 = arith.constant 0 : index
    %c0_4 = arith.constant 0 : index
    %11 = vector.load %arg3[%c0_3, %c0_4] : memref<8x1xf32, #tpu.memory_space<vmem>>, vector<8x1xf32>
    %12 = arith.mulf %11, %10 : vector<8x1xf32>
    %c0_5 = arith.constant 0 : index
    %c0_6 = arith.constant 0 : index
    %13 = vector.load %arg4[%c0_5, %c0_6] : memref<8x1xf32, #tpu.memory_space<vmem>>, vector<8x1xf32>
    %14 = vector.broadcast %12 : vector<8x1xf32> to vector<8x256xf32>
    %15 = arith.mulf %14, %0 : vector<8x256xf32>
    %16 = vector.broadcast %13 : vector<8x1xf32> to vector<8x256xf32>
    %17 = arith.addf %15, %16 : vector<8x256xf32>
    %c0_7 = arith.constant 0 : index
    %c0_8 = arith.constant 0 : index
    %18 = vector.load %arg5[%c0_7, %c0_8] : memref<8x256xf32, #tpu.memory_space<vmem>>, vector<8x256xf32>
    tpu.vector_store %arg5[%c0_7, %c0_8], %17 {strides = array<i32>} : memref<8x256xf32, #tpu.memory_space<vmem>>, vector<8x256xf32>,
    return
  }
  func.func @transform_0(%arg0: i32, %arg1: memref<1xf32, #tpu.memory_space<smem>>) -> (i32, i32) {
    %c0_i32 = arith.constant 0 : i32
    %c0_i32_0 = arith.constant 0 : i32
    return %arg0, %c0_i32 : i32, i32
  }
  func.func @transform_1(%arg0: i32, %arg1: memref<1xf32, #tpu.memory_space<smem>>) -> (i32, i32) {
    %c0_i32 = arith.constant 0 : i32
    %c0_i32_0 = arith.constant 0 : i32
    return %arg0, %c0_i32 : i32, i32
  }
  func.func @transform_2(%arg0: i32, %arg1: memref<1xf32, #tpu.memory_space<smem>>) -> (i32, i32) {
    %c0_i32 = arith.constant 0 : i32
    %c0_i32_0 = arith.constant 0 : i32
    return %arg0, %c0_i32 : i32, i32
  }
  func.func @transform_3(%arg0: i32, %arg1: memref<1xf32, #tpu.memory_space<smem>>) -> (i32, i32) {
    %c0_i32 = arith.constant 0 : i32
    %c0_i32_0 = arith.constant 0 : i32
    return %arg0, %c0_i32 : i32, i32
  }
}

</mosaic_0001>

<llo_original>
// kernel: tpu_custom_call.1
$region0: #{tpu_custom_call.1}
  #allocation0 [shape = 'u32[]', space=smem, size = 0x4, offset = 0x4, fixed_abs, tag = 'smem constant byte address 0x4 - core index']
  #allocation1 [shape = 'u32[144,128]{1,0:T(1,128)}', space=vmem, size = 0x12000, scoped, tag = 'internal scratch']
  #allocation2 [shape = 's32[1]{0}', space=sflag, size = 0x4, scoped, tag = 'scoped memory for tpu_custom_call.1']
  #allocation3 [shape = 'f32[1]{0:T(128)S(6)}', space=smem, size = 0x200, scoped, tag = 'prefetched SMEM operand 0']
  %s0 = inlined_call_operand.<no memory space> [shape: f32[1], index: 0, kind: input, shape index: {}]
  %s1 = inlined_call_operand.vmem [shape: f32[8,256], index: 1, kind: input, shape index: {}]
  %s2 = inlined_call_operand.vmem [shape: f32[8,1], index: 2, kind: input, shape index: {}]
  %s3 = inlined_call_operand.vmem [shape: f32[8,1], index: 3, kind: input, shape index: {}]
  %s4 = inlined_call_operand.hbm [shape: f32[8,256], index: 4, kind: output, shape index: {}]
  %s5 = sld [smem:[#allocation0]]
  $region22: #{tpu_custom_call.1} parent=0
    _
  %s7 = ssub.s32 1, %s5
  %s8 = scalar_select 0, %s7, %s5
  %9 = sst [smem:[#allocation3]] %s0
  $region1: #{tpu_custom_call.1} parent=0
    #allocation4 [shape = 'u8[8192]{0}', space=vmem, size = 0x2000, scoped, tag = 'output window, operand 0, single buffered']
    #allocation5 [shape = 's32[1]{0}', space=sflag, size = 0x4, scoped, tag = 'scoped memory for tpu_custom_call.1']
    %10 = vsyncpa [#allocation5], 0
    // Predicated region
    $region2: #{tpu_custom_call.1} parent=1 // pred_check
      _
    $region3: #{tpu_custom_call.1} parent=1 // pred_check_branch
      %12 = sbr.rel (0) target = $region5
    $region4: #{tpu_custom_call.1} parent=1 // pred_region
      _
    $region5: #{tpu_custom_call.1} parent=1 // pred_fallthru
      _
    // Predicated region
    $region6: #{tpu_custom_call.1} parent=1 // pred_check
      _
    $region7: #{tpu_custom_call.1} parent=1 // pred_check_branch
      %14 = sbr.rel (0) target = $region9
    $region8: #{tpu_custom_call.1} parent=1 // pred_region
      _
    $region9: #{tpu_custom_call.1} parent=1 // pred_fallthru
      _
    // Predicated region
    $region10: #{tpu_custom_call.1} parent=1 // pred_check
      _
    $region11: #{tpu_custom_call.1} parent=1 // pred_check_branch
      %16 = sbr.rel (0) target = $region13
    $region12: #{tpu_custom_call.1} parent=1 // pred_region
      _
    $region13: #{tpu_custom_call.1} parent=1 // pred_fallthru
      _
    %v17 = vld [vmem:[%s1] sm:$0xff]
    %v18 = vld [vmem:[%s1 + $0x8] sm:$0xff]
    %v19 = vmul.f32 %v17, %v17
    %v20 = vmul.f32 %v18, %v18
    %v21 = vadd.f32 %v19, %v20
    %22 = vadd.xlane.f32.xlu0 %v21
    %v23 = vpop.xlane.xlu0 %22
    %v24 = vmul.f32 %v23, 0.00390625
    %s25 = sld [smem:[#allocation3]]
    %s26 = sand.u32 2147483647, %s25
    %v27 = vstv %s26
    %v28 = vadd.f32 %v24, %v27
    %v29 = vrsqrt.pop %v28
    %v30 = vld [vmem:[%s2] sm:$0xff]
    %v31 = vmul.f32 %v30, %v29
    %v32 = vld [vmem:[%s3] sm:$0xff]
    %34 = vset.pattern.permute.xlu0 0
    %35 = vperm.xlu0 %34, %v31
    %v36 = vpop.permute.xlu0 %35
    %v38 = vmul.f32 %v36, %v17
    %v39 = vmul.f32 %v36, %v18
    %41 = vset.pattern.permute.xlu0 0
    %42 = vperm.xlu0 %41, %v32
    %v43 = vpop.permute.xlu0 %42
    %v45 = vadd.f32 %v38, %v43
    %v46 = vadd.f32 %v39, %v43
    %47 = vst [vmem:[#allocation4] sm:$0xff] %v45
    %48 = vst [vmem:[#allocation4 + $0x8] sm:$0xff] %v46
    // Predicated region
    $region14: #{tpu_custom_call.1} parent=1 // pred_check
      _
    $region15: #{tpu_custom_call.1} parent=1 // pred_check_branch
      %50 = sbr.rel (0) target = $region17
    $region16: #{tpu_custom_call.1} parent=1 // pred_region
      %s52 = ssub.s32 256, 256
      %53 = vsyncadd [#allocation5], %s52
      %s55 = sshll.u32 [#allocation4], 4
      %s56 = int_to_ptr.vmem [resolvable:$true] %s55
      %58 = dma.vmem_to_hbm [thread:$0]  %s56, 256, %s4, [#allocation5]
    $region17: #{tpu_custom_call.1} parent=1 // pred_fallthru
      _
    // Predicated region
    $region18: #{tpu_custom_call.1} parent=1 // pred_check
      _
    $region19: #{tpu_custom_call.1} parent=1 // pred_check_branch
      %60 = sbr.rel (0) target = $region21
    $region20: #{tpu_custom_call.1} parent=1 // pred_region
      %61 = dma.done [#allocation5], 256
    $region21: #{tpu_custom_call.1} parent=1 // pred_fallthru
      _
    %62 = vsyncpa [#allocation5], 1

</llo_original>
